<compile_context>
chip_gen: v6e
topology: v6e:2x2x1
jax: 0.10.0
libtpu: 0.0.40
codegen_flags: <defaults>
</compile_context>

<pallas_src>
import functools
import math

import jax
import jax.numpy as jnp
from jax import lax
from jax.experimental import pallas as pl
from jax.experimental.pallas import tpu as pltpu

_ROW_TILE = 512  # row tile for the token-parallel q/k/v kernel


def _round_up(x, m):
    return ((x + m - 1) // m) * m


def _row_tile(n):
    """Row tile + padded row count, keeping padding waste under ~10%."""
    n8 = _round_up(n, 8)
    tile = min(_ROW_TILE, n8)
    while tile > 8 and (_round_up(n8, tile) - n8) * 10 > n8:
        tile //= 2
    return tile, _round_up(n8, tile)


def _pick_tq(l, d2):
    """Query tile for the attention kernel.

    Keeps the double-buffered (TQ, L, D2) x2d slab (and the (TQ*L, C) fused
    edge intermediates) inside a v7x-safe VMEM budget while producing
    B * (L // TQ) independent grid points for megacore / 2-TC sharding.
    TQ always divides L and is a multiple of 8 (or equals L).
    """
    tq = l
    budget = 6 << 20  # bytes for one f32 x2d slab
    while tq % 16 == 0 and tq * l * d2 * 4 > budget:
        tq //= 2
    return tq


# ---------------------------------------------------------------------------
# Kernel 1: fused q|k|v projection of x3d tokens (single (C, 3C) bf16 weight).
# ---------------------------------------------------------------------------
def _qkv_kernel(x_ref, w_ref, b_ref, o_ref):
    x = x_ref[...].astype(jnp.bfloat16)
    o_ref[...] = (jnp.dot(x, w_ref[...], preferred_element_type=jnp.float32)
                  + b_ref[...]).astype(o_ref.dtype)


# ---------------------------------------------------------------------------
# Kernel 2: query-tiled attention with the edge projection fused in, plus the
# final output projection.
# ---------------------------------------------------------------------------
def _attn_kernel(qkv_ref, x2d_ref, w1_ref, b1_ref, g_ref, bt_ref,
                 wek_ref, bek_ref, weq_ref, beq_ref, wfc_ref, bfc_ref,
                 mask_ref, o_ref, *, nhead, eps):
    f32 = jnp.float32
    bf16 = jnp.bfloat16
    tq = o_ref.shape[1]
    C = o_ref.shape[2]
    L = qkv_ref.shape[1]
    d2 = x2d_ref.shape[3]
    dh = C // nhead
    scale = 1.0 / math.sqrt(dh)

    # ---- split the fused q|k|v block (lane slices at multiples of C) ------
    qkv = qkv_ref[0]                                    # (L, 3C) f32
    q_all = qkv[:, :C] * scale                          # q pre-scaled once:
    k_all = qkv[:, C:2 * C]                             #   s = (qk + ex)/sqrt(dh)
    v_all = qkv[:, 2 * C:]

    row0 = pl.program_id(1) * tq
    if tq % 8 == 0:
        row0 = pl.multiple_of(row0, 8)
    q_tile = qkv_ref[0, pl.ds(row0, tq), :][:, :C] * scale   # (tq, C)

    # ---- fused edge projection: e = relu(LN(x2d @ w1 + b1)) ---------------
    x2 = x2d_ref[0].reshape(tq * L, d2)
    e = jnp.dot(x2.astype(bf16), w1_ref[...],
                preferred_element_type=f32) + b1_ref[...]
    mu = jnp.mean(e, axis=-1, keepdims=True)
    dev = e - mu
    var = jnp.mean(dev * dev, axis=-1, keepdims=True)
    e = dev * lax.rsqrt(var + eps) * g_ref[...] + bt_ref[...]
    e = jnp.maximum(e, 0.0)                             # (tq*L, C) f32

    # ---- ex[h,i,j] = sum_{c in head h} efk[i,j,c] * q[j,c]  (lane-dense,
    #      per-head reduction done with a (H, C) block-mask matmul on MXU) ---
    efk = jnp.dot(e.astype(bf16), wek_ref[...],
                  preferred_element_type=f32) + bek_ref[...]        # (tq*L, C)
    t = (efk.reshape(tq, L, C) * q_all[None, :, :]).reshape(tq * L, C)
    ex = jnp.einsum('hc,rc->hr', mask_ref[...], t,
                    preferred_element_type=f32).reshape(nhead, tq, L)

    # ---- per-head qk on the MXU (head-major batched matmul) ---------------
    qh = q_tile.reshape(tq, nhead, dh).transpose(1, 0, 2)           # (H, tq, dh)
    kh = k_all.reshape(L, nhead, dh).transpose(1, 0, 2)             # (H, L, dh)
    vh = v_all.reshape(L, nhead, dh).transpose(1, 0, 2)             # (H, L, dh)
    qk = jnp.einsum('hid,hjd->hij', qh, kh, preferred_element_type=f32)
    s = qk + ex                                                     # (H, tq, L)

    # ---- softmax over keys -------------------------------------------------
    m = jnp.max(s, axis=-1, keepdims=True)
    p = jnp.exp(s - m)
    w = p * pl.reciprocal(jnp.sum(p, axis=-1, keepdims=True), approx=True)
    # TODO(synk): attention-weight dropout is identity (inference mode).

    # ---- x1 = softmax(s) @ v, written back lane-dense (tq, C) -------------
    x1 = jnp.einsum('hij,hjd->hid', w, vh,
                    preferred_element_type=f32)                     # (H, tq, dh)
    x1 = x1.transpose(1, 0, 2).reshape(tq, C)

    # ---- x2 = sum_j s * efq with efc_q applied AFTER the j-contraction:
    #      sum_j s[h,i,j] (e[i,j,:] @ Weq + beq)
    #        = (sum_j s[h,i,j] e[i,j,:]) @ Weq + (sum_j s[h,i,j]) beq --------
    e3 = e.reshape(tq, L, C)
    s_i = s.transpose(1, 0, 2)                                      # (tq, H, L)
    u = jnp.einsum('ihj,ijc->ihc', s_i, e3,
                   preferred_element_type=f32)                      # (tq, H, C)
    vproj = jnp.dot(u.reshape(tq * nhead, C), weq_ref[...],
                    preferred_element_type=f32).reshape(tq, nhead, C)
    mask = mask_ref[...]                                            # (H, C)
    x2 = jnp.sum(vproj * mask[None, :, :], axis=1)                  # (tq, C)
    rs = jnp.sum(s_i, axis=-1)                                      # (tq, H)
    x2 = x2 + jnp.dot(rs, mask, preferred_element_type=f32) * beq_ref[...]

    # ---- fused output projection -------------------------------------------
    out = jnp.dot(x1 + x2, wfc_ref[...],
                  preferred_element_type=f32) + bfc_ref[...]
    # TODO(synk): output dropout is identity (inference mode).
    o_ref[0] = out.astype(o_ref.dtype)


# ---------------------------------------------------------------------------
# Wrapper: full X3DAttention forward.
# ---------------------------------------------------------------------------
def x3d_attention(x2d, x3d, params, nhead):
    """Pallas equivalent of X3DAttention.forward (dropout = identity).

    x2d : (B, L, L, dim2d)   x3d : (B, L, ninp)   returns (B, L, ninp) f32
    """
    f32 = jnp.float32
    bf16 = jnp.bfloat16
    x2d = x2d.astype(f32)
    x3d = x3d.astype(f32)
    B, L, C = x3d.shape
    D2 = x2d.shape[-1]
    assert C % nhead == 0
    dh = C // nhead
    H = nhead

    # --- parameter prep (transpose/cast once; bf16 for the big MXU operands)
    w_qkv = jnp.concatenate(
        [params["wq"].T, params["wk"].T, params["wv"].T], axis=1).astype(bf16)
    b_qkv = jnp.concatenate(
        [params["bq"], params["bk"], params["bv"]]).reshape(1, 3 * C).astype(f32)
    w1_t = params["w1"].T.astype(bf16)                       # (D2, C)
    b1 = params["b1"].reshape(1, C).astype(f32)
    ln_g = params["ln_g"].reshape(1, C).astype(f32)
    ln_b = params["ln_b"].reshape(1, C).astype(f32)
    wek_t = params["wek"].T.astype(bf16)                     # (C, C) big matmul
    bek = params["bek"].reshape(1, C).astype(f32)
    weq_t = params["weq"].T.astype(f32)                      # small matmul: f32
    beq = params["beq"].reshape(1, C).astype(f32)
    wfc_t = params["wfc"].T.astype(f32)
    bfc = params["bfc"].reshape(1, C).astype(f32)
    # head-selection mask: mask_hc[h, c] = 1 iff channel c belongs to head h
    mask_hc = (jnp.arange(C)[None, :] // dh ==
               jnp.arange(H)[:, None]).astype(f32)           # (H, C)

    # ---- kernel 1: fused q|k|v projection over all B*L tokens -------------
    n = B * L
    tile, n_pad = _row_tile(n)
    x_flat = x3d.reshape(n, C)
    if n_pad != n:
        x_flat = jnp.pad(x_flat, ((0, n_pad - n), (0, 0)))

    qkv_flat = pl.pallas_call(
        _qkv_kernel,
        out_shape=jax.ShapeDtypeStruct((n_pad, 3 * C), f32),
        grid_spec=pltpu.PrefetchScalarGridSpec(
            num_scalar_prefetch=0,
            grid=(n_pad // tile,),
            in_specs=[pl.BlockSpec((tile, C), lambda i: (i, 0)),
                      pl.BlockSpec((C, 3 * C), lambda i: (0, 0)),
                      pl.BlockSpec((1, 3 * C), lambda i: (0, 0))],
            out_specs=pl.BlockSpec((tile, 3 * C), lambda i: (i, 0)),
        ),
        compiler_params=pltpu.CompilerParams(dimension_semantics=("parallel",)),
        cost_estimate=pl.CostEstimate(
            flops=2 * n_pad * C * 3 * C,
            transcendentals=0,
            bytes_accessed=4 * n_pad * C + 4 * n_pad * 3 * C
                           + 2 * C * 3 * C + 4 * 3 * C),
    )(x_flat, w_qkv, b_qkv)
    qkv = qkv_flat[:n].reshape(B, L, 3 * C)

    # ---- kernel 2: fused edge-proj + attention + output projection --------
    TQ = _pick_tq(L, D2)
    grid = (B, L // TQ)
    wspec = lambda b, i: (0, 0)

    out = pl.pallas_call(
        functools.partial(_attn_kernel, nhead=nhead, eps=1e-5),
        out_shape=jax.ShapeDtypeStruct((B, L, C), f32),
        grid_spec=pltpu.PrefetchScalarGridSpec(
            num_scalar_prefetch=0,
            grid=grid,
            in_specs=[
                pl.BlockSpec((1, L, 3 * C), lambda b, i: (b, 0, 0)),     # qkv
                pl.BlockSpec((1, TQ, L, D2), lambda b, i: (b, i, 0, 0)), # x2d
                pl.BlockSpec((D2, C), wspec),                            # w1
                pl.BlockSpec((1, C), wspec),                             # b1
                pl.BlockSpec((1, C), wspec),                             # ln_g
                pl.BlockSpec((1, C), wspec),                             # ln_b
                pl.BlockSpec((C, C), wspec),                             # wek
                pl.BlockSpec((1, C), wspec),                             # bek
                pl.BlockSpec((C, C), wspec),                             # weq
                pl.BlockSpec((1, C), wspec),                             # beq
                pl.BlockSpec((C, C), wspec),                             # wfc
                pl.BlockSpec((1, C), wspec),                             # bfc
                pl.BlockSpec((H, C), wspec),                             # mask
            ],
            out_specs=pl.BlockSpec((1, TQ, C), lambda b, i: (b, i, 0)),
        ),
        # query tiling keeps the blocks inside the default scoped-VMEM limit
        # on all generations (incl. v7x's 64 MiB), so no vmem_limit override.
        compiler_params=pltpu.CompilerParams(
            dimension_semantics=("parallel", "parallel")),
        cost_estimate=pl.CostEstimate(
            flops=2 * B * L * L * C * (D2 + C + 2 * H + 2)
                  + 2 * B * L * C * C * (H + 1),
            transcendentals=B * H * L * L + B * L * L,
            bytes_accessed=4 * (B * L * L * D2
                                + B * L * 3 * C * (L // TQ)
                                + B * L * C)
                           + 2 * (D2 * C + C * C) + 4 * 2 * C * C
                           + 4 * (8 * C + H * C)),
    )(qkv, x2d, w1_t, b1, ln_g, ln_b, wek_t, bek, weq_t, beq, wfc_t, bfc,
      mask_hc)
    return out


# ---------------------------------------------------------------------------
# Pure-JAX reference matching the PyTorch module (dropout = identity).
# ---------------------------------------------------------------------------
def _reference(x2d, x3d, p, nhead):
    with jax.default_matmul_precision("highest"):
        x2d = x2d.astype(jnp.float32)
        x3d = x3d.astype(jnp.float32)
        B, L, C = x3d.shape
        dh = C // nhead

        def lin(x, w, b):
            return jnp.dot(x, w.T) + b

        def heads(x):
            x = x.reshape(x.shape[:-1] + (nhead, dh))
            return jnp.swapaxes(x, -3, -2)

        qh = heads(lin(x3d, p["wq"], p["bq"]))          # (B, H, L, dh)
        kh = heads(lin(x3d, p["wk"], p["bk"]))
        vh = heads(lin(x3d, p["wv"], p["bv"]))

        e = lin(x2d, p["w1"], p["b1"])
        mu = jnp.mean(e, axis=-1, keepdims=True)
        var = jnp.mean((e - mu) ** 2, axis=-1, keepdims=True)
        e = (e - mu) / jnp.sqrt(var + 1e-5) * p["ln_g"] + p["ln_b"]
        e = jax.nn.relu(e)

        efq = heads(lin(e, p["weq"], p["beq"]))         # (B, L, H, L, dh)
        efk = heads(lin(e, p["wek"], p["bek"]))

        s = jnp.einsum("bhid,bhjd->bhij", qh, kh)
        ex = jnp.sum(efk * qh[:, None], axis=-1)        # (B, L, H, L)
        s = (s + jnp.transpose(ex, (0, 2, 1, 3))) / math.sqrt(C / nhead)
        w = jax.nn.softmax(s, axis=-1)

        x1 = jnp.einsum("bhij,bhjd->bhid", w, vh)
        x2 = jnp.einsum("bhij,bihjd->bhid", s, efq)
        x = jnp.swapaxes(x1 + x2, 1, 2).reshape(B, L, C)
        return lin(x, p["wfc"], p["bfc"])


if __name__ == "__main__":
    B, L = 2, 8
    ninp, nhead, dim2d = 32, 4, 16

    key = jax.random.PRNGKey(0)
    ks = jax.random.split(key, 18)

    def init_linear(kw, kb, dout, din):
        bound = 1.0 / math.sqrt(din)
        w = jax.random.uniform(kw, (dout, din), jnp.float32, -bound, bound)
        b = jax.random.uniform(kb, (dout,), jnp.float32, -bound, bound)
        return w, b

    wq, bq = init_linear(ks[0], ks[1], ninp, ninp)
    wk, bk = init_linear(ks[2], ks[3], ninp, ninp)
    wv, bv = init_linear(ks[4], ks[5], ninp, ninp)
    w1, b1 = init_linear(ks[6], ks[7], ninp, dim2d)
    weq, beq = init_linear(ks[8], ks[9], ninp, ninp)
    wek, bek = init_linear(ks[10], ks[11], ninp, ninp)
    wfc, bfc = init_linear(ks[12], ks[13], ninp, ninp)
    ln_g = 1.0 + 0.1 * jax.random.normal(ks[14], (ninp,), jnp.float32)
    ln_b = 0.1 * jax.random.normal(ks[15], (ninp,), jnp.float32)

    x2d = jax.random.normal(ks[16], (B, L, L, dim2d), jnp.float32)
    x3d = jax.random.normal(ks[17], (B, L, ninp), jnp.float32)

    params = dict(wq=wq, bq=bq, wk=wk, bk=bk, wv=wv, bv=bv,
                  w1=w1, b1=b1, ln_g=ln_g, ln_b=ln_b,
                  weq=weq, beq=beq, wek=wek, bek=bek,
                  wfc=wfc, bfc=bfc)

    out = x3d_attention(x2d, x3d, params, nhead)
    out = jax.block_until_ready(out)

    ref = _reference(x2d, x3d, params, nhead)
    assert out.shape == (B, L, ninp), out.shape
    err = float(jnp.max(jnp.abs(out - ref)))
    scale = float(jnp.max(jnp.abs(ref))) + 1e-6
    # bf16 MXU operands are used for the large projections (per the perf
    # review), so validate at a bf16-level tolerance against the f32
    # "highest"-precision reference.
    assert err <= 5e-2 * scale, (err, scale)

    print("KERNEL_OK")
</pallas_src>

<mosaic_0001>
module attributes {stable_mosaic.version = 11 : i64} {
  func.func @_qkv_kernel(%arg0: i32, %arg1: memref<16x32xf32, #tpu.memory_space<vmem>>, %arg2: memref<32x96xbf16, #tpu.memory_space<vmem>>, %arg3: memref<1x96xf32, #tpu.memory_space<vmem>>, %arg4: memref<16x96xf32, #tpu.memory_space<vmem>>) attributes {dimension_semantics = [#tpu.dimension_semantics<parallel>], iteration_bounds = array<i64: 1>, scalar_prefetch = 0 : i64, scratch_operands = 0 : i64, tpu.core_type = #tpu.core_type<tc>, window_params = [{transform_indices = @transform_0, window_bounds = array<i64: 16, 32>}, {pipeline_mode = #tpu.pipeline_mode<synchronous>, transform_indices = @transform_1, window_bounds = array<i64: 32, 96>}, {pipeline_mode = #tpu.pipeline_mode<synchronous>, transform_indices = @transform_2, window_bounds = array<i64: 1, 96>}, {transform_indices = @transform_3, window_bounds = array<i64: 16, 96>}]} {
    %c0 = arith.constant 0 : index
    %c0_0 = arith.constant 0 : index
    %0 = vector.load %arg1[%c0, %c0_0] : memref<16x32xf32, #tpu.memory_space<vmem>>, vector<16x32xf32>
    %1 = arith.truncf %0 : vector<16x32xf32> to vector<16x32xbf16>
    %c0_1 = arith.constant 0 : index
    %c0_2 = arith.constant 0 : index
    %2 = vector.load %arg2[%c0_1, %c0_2] : memref<32x96xbf16, #tpu.memory_space<vmem>>, vector<32x96xbf16>
    %cst = arith.constant dense<0.000000e+00> : vector<16x96xf32>
    %3 = tpu.matmul %1, %2, %cst {dimension_numbers = #tpu.dot_dimension_numbers<[1], [0], [0], [1], [0, 0, 1, 1], [], []>} : vector<16x32xbf16>, vector<32x96xbf16>, vector<16x96xf32> -> vector<16x96xf32>
    %c0_3 = arith.constant 0 : index
    %c0_4 = arith.constant 0 : index
    %4 = vector.load %arg3[%c0_3, %c0_4] : memref<1x96xf32, #tpu.memory_space<vmem>>, vector<1x96xf32>
    %5 = vector.broadcast %4 : vector<1x96xf32> to vector<16x96xf32>
    %6 = arith.addf %3, %5 : vector<16x96xf32>
    %c0_5 = arith.constant 0 : index
    %c0_6 = arith.constant 0 : index
    %7 = vector.load %arg4[%c0_5, %c0_6] : memref<16x96xf32, #tpu.memory_space<vmem>>, vector<16x96xf32>
    tpu.vector_store %arg4[%c0_5, %c0_6], %6 {strides = array<i32>} : memref<16x96xf32, #tpu.memory_space<vmem>>, vector<16x96xf32>,
    return
  }
  func.func @transform_0(%arg0: i32) -> (i32, i32) {
    %c0_i32 = arith.constant 0 : i32
    %c0_i32_0 = arith.constant 0 : i32
    return %arg0, %c0_i32 : i32, i32
  }
  func.func @transform_1(%arg0: i32) -> (i32, i32) {
    %c0_i32 = arith.constant 0 : i32
    %c0_i32_0 = arith.constant 0 : i32
    %c0_i32_1 = arith.constant 0 : i32
    return %c0_i32, %c0_i32_0 : i32, i32
  }
  func.func @transform_2(%arg0: i32) -> (i32, i32) {
    %c0_i32 = arith.constant 0 : i32
    %c0_i32_0 = arith.constant 0 : i32
    %c0_i32_1 = arith.constant 0 : i32
    return %c0_i32, %c0_i32_0 : i32, i32
  }
  func.func @transform_3(%arg0: i32) -> (i32, i32) {
    %c0_i32 = arith.constant 0 : i32
    %c0_i32_0 = arith.constant 0 : i32
    return %arg0, %c0_i32 : i32, i32
  }
}

</mosaic_0001>

<llo_original>
// kernel: tpu_custom_call.1
$region0: #{tpu_custom_call.1}
  #allocation0 [shape = 'u32[]', space=smem, size = 0x4, offset = 0x4, fixed_abs, tag = 'smem constant byte address 0x4 - core index']
  #allocation1 [shape = 'u32[144,128]{1,0:T(1,128)}', space=vmem, size = 0x12000, scoped, tag = 'internal scratch']
  %s0 = inlined_call_operand.hbm [shape: f32[16,32], index: 0, kind: input, shape index: {}]
  %s1 = inlined_call_operand.hbm [shape: bf16[32,96], index: 1, kind: input, shape index: {}]
  %s2 = inlined_call_operand.vmem [shape: f32[1,96], index: 2, kind: input, shape index: {}]
  %s3 = inlined_call_operand.hbm [shape: f32[16,96], index: 3, kind: output, shape index: {}]
  %s4 = sld [smem:[#allocation0]]
  $region30: #{tpu_custom_call.1} parent=0
    _
  %s6 = ssub.s32 1, %s4
  %s7 = scalar_select 0, %s6, %s4
  $region1: #{tpu_custom_call.1} parent=0
    #allocation2 [shape = 'u8[8192]{0}', space=vmem, size = 0x2000, scoped, tag = 'input window, operand 0, single buffered']
    #allocation3 [shape = 's32[1]{0}', space=sflag, size = 0x4, scoped, tag = 'scoped memory for tpu_custom_call.1']
    #allocation4 [shape = 's32[1]{0}', space=sflag, size = 0x4, scoped, tag = 'scoped memory for tpu_custom_call.1']
    #allocation5 [shape = 'u8[8192]{0}', space=vmem, size = 0x2000, scoped, tag = 'input window, operand 1, single buffered']
    #allocation6 [shape = 's32[1]{0}', space=sflag, size = 0x4, scoped, tag = 'scoped memory for tpu_custom_call.1']
    #allocation7 [shape = 'u8[8192]{0}', space=vmem, size = 0x2000, scoped, tag = 'output window, operand 0, single buffered']
    %8 = vsyncpa [#allocation3], 0
    %9 = vsyncpa [#allocation6], 0
    %10 = vsyncpa [#allocation4], 0
    // Predicated region
    $region2: #{tpu_custom_call.1} parent=1 // pred_check
      _
    $region3: #{tpu_custom_call.1} parent=1 // pred_check_branch
      %12 = sbr.rel (0) target = $region5
    $region4: #{tpu_custom_call.1} parent=1 // pred_region
      %s14 = ssub.s32 256, 256
      %15 = vsyncadd [#allocation3], %s14
      %s16 = sshll.u32 [#allocation2], 4
      %s17 = int_to_ptr.vmem [resolvable:$true] %s16
      %22 = dma.hbm_to_vmem [thread:$0]  %s0, 256, %s17, [#allocation3], 128, 128, 8
    $region5: #{tpu_custom_call.1} parent=1 // pred_fallthru
      _
    // Predicated region
    $region6: #{tpu_custom_call.1} parent=1 // pred_check
      _
    $region7: #{tpu_custom_call.1} parent=1 // pred_check_branch
      %24 = sbr.rel (0) target = $region9
    $region8: #{tpu_custom_call.1} parent=1 // pred_region
      %s26 = ssub.s32 256, 256
      %27 = vsyncadd [#allocation6], %s26
      %s28 = sshll.u32 [#allocation5], 4
      %s29 = int_to_ptr.vmem [resolvable:$true] %s28
      %34 = dma.hbm_to_vmem [thread:$0]  %s1, 256, %s29, [#allocation6], 64, 64, 4
    $region9: #{tpu_custom_call.1} parent=1 // pred_fallthru
      _
    // Predicated region
    $region10: #{tpu_custom_call.1} parent=1 // pred_check
      _
    $region11: #{tpu_custom_call.1} parent=1 // pred_check_branch
      %36 = sbr.rel (0) target = $region13
    $region12: #{tpu_custom_call.1} parent=1 // pred_region
      _
    $region13: #{tpu_custom_call.1} parent=1 // pred_fallthru
      _
    // Predicated region
    $region14: #{tpu_custom_call.1} parent=1 // pred_check
      _
    $region15: #{tpu_custom_call.1} parent=1 // pred_check_branch
      %38 = sbr.rel (0) target = $region17
    $region16: #{tpu_custom_call.1} parent=1 // pred_region
      %39 = dma.done [#allocation3], 256
    $region17: #{tpu_custom_call.1} parent=1 // pred_fallthru
      _
    // Predicated region
    $region18: #{tpu_custom_call.1} parent=1 // pred_check
      _
    $region19: #{tpu_custom_call.1} parent=1 // pred_check_branch
      %41 = sbr.rel (0) target = $region21
    $region20: #{tpu_custom_call.1} parent=1 // pred_region
      %42 = dma.done [#allocation6], 256
    $region21: #{tpu_custom_call.1} parent=1 // pred_fallthru
      _
    %v44 = vld [vmem:[#allocation2] sm:$0xff]
    %v45 = vld [vmem:[#allocation2 + $0x8] sm:$0xff]
    %v46 = vpack.c.bf16 %v45, %v44
    %v47 = vld [vmem:[#allocation5] sm:$0xf]
    %v48 = vld [vmem:[#allocation5 + $0x4] sm:$0xf]
    %v49 = vld [vmem:[#allocation5 + $0x8] sm:$0xf]
    %v50 = vld [vmem:[#allocation5 + $0xc] sm:$0xf]
    %v51 = vld [vmem:[%s2] sm:$0x1]
    %v53 = vlaneseq
    %v54 = vshrl.u32 %v53, 7
    %v55 = vsub.s32 0, %v54
    %v56 = vrot.slane %v51, %v55
    %v62 = vunpack.c.l.b16 %v47
    %v63 = vunpack.c.l.b16 %v48
    %v64 = vunpack.c.l.b16 %v49
    %v65 = vunpack.c.l.b16 %v50
    %v66 = vpack.c.b16 %v63, %v62
    %v67 = vpack.c.b16 %v65, %v64
    %vm70 = vcmask 261120
    %v72 = vsel %vm70, %v46, 0
    %74 = vmatprep.subr.bf16.mxu0 0
    %75 = vmatpush1.bf16.msra.mxu0 0
    %76 = vmatprep.subr.bf16.mxu0 0
    %77 = vmatpush1.bf16.msra.mxu0 0
    %78 = vmatprep.subr.bf16.mxu0 0
    %79 = vmatpush1.bf16.msra.mxu0 0
    %80 = vmatprep.subr.bf16.mxu0 0
    %81 = vmatpush1.bf16.msra.mxu0 0
    %82 = vmatprep.subr.bf16.mxu0 0
    %83 = vmatpush1.bf16.msra.mxu0 0
    %84 = vmatprep.subr.bf16.mxu0 0
    %85 = vmatpush1.bf16.msra.mxu0 0
    %86 = vmatprep.subr.bf16.mxu0 0
    %87 = vmatpush1.bf16.msra.mxu0 %v67
    %88 = vmatprep.subr.bf16.mxu0 0
    %89 = vmatpush1.bf16.msra.mxu0 %v66
    %90 = vmatprep.subr.bf16.mxu0 0
    %91 = vmatpush2.bf16.msra.mxu0 0
    %92 = vmatprep.subr.bf16.mxu0 0
    %93 = vmatpush2.bf16.msra.mxu0 0
    %94 = vmatprep.subr.bf16.mxu0 0
    %95 = vmatpush2.bf16.msra.mxu0 0
    %96 = vmatprep.subr.bf16.mxu0 0
    %97 = vmatpush2.bf16.msra.mxu0 0
    %98 = vmatprep.subr.bf16.mxu0 0
    %99 = vmatpush2.bf16.msra.mxu0 0
    %100 = vmatprep.subr.bf16.mxu0 0
    %101 = vmatpush2.bf16.msra.mxu0 0
    %102 = vmatprep.subr.bf16.mxu0 0
    %103 = vmatpush2.bf16.msra.mxu0 0
    %104 = vmatprep.subr.bf16.mxu0 0
    %105 = vmatpush2.bf16.msra.mxu0 0
    %106 = vmatprep.mubr.bf16.mxu0 0
    %107 = vmatmul.mubr.bf16.gmra.mxu0 %v72
    %v108 = vpop.f32.mrf.mxu0
    %v109 = vadd.f32 %v56, %v108
    %v110 = vpop.f32.mrf.mxu0
    %v111 = vpop.f32.mrf.mxu0
    %v112 = vadd.f32 %v56, %v111
    %v113 = vpop.f32.mrf.mxu0
    %114 = vdwg.mxu0
    %vm115 = vcmask 785408
    %116 = vst.msk [vmem:[#allocation7] sm:$0xff] %vm115, %v109
    %117 = vst.msk [vmem:[#allocation7 + $0x8] sm:$0xff] %vm115, %v112
    // Predicated region
    $region22: #{tpu_custom_call.1} parent=1 // pred_check
      _
    $region23: #{tpu_custom_call.1} parent=1 // pred_check_branch
      %119 = sbr.rel (0) target = $region25
    $region24: #{tpu_custom_call.1} parent=1 // pred_region
      %s121 = ssub.s32 256, 256
      %122 = vsyncadd [#allocation4], %s121
      %s123 = sshll.u32 [#allocation7], 4
      %s124 = int_to_ptr.vmem [resolvable:$true] %s123
      %129 = dma.vmem_to_hbm [thread:$0]  %s124, 256, %s3, [#allocation4], 128, 128, 8
    $region25: #{tpu_custom_call.1} parent=1 // pred_fallthru
      _
    // Predicated region
    $region26: #{tpu_custom_call.1} parent=1 // pred_check
      _
    $region27: #{tpu_custom_call.1} parent=1 // pred_check_branch
      %131 = sbr.rel (0) target = $region29
    $region28: #{tpu_custom_call.1} parent=1 // pred_region
      %132 = dma.done [#allocation4], 256
    $region29: #{tpu_custom_call.1} parent=1 // pred_fallthru
      _
    %133 = vsyncpa [#allocation3], 1
    %134 = vsyncpa [#allocation6], 1
    %135 = vsyncpa [#allocation4], 1

</llo_original>
